<compile_context>
chip_gen: v6e
topology: v6e:2x2x1
jax: 0.10.0
libtpu: 0.0.40
codegen_flags: <defaults>
</compile_context>

<pallas_src>
import math

import jax
import jax.numpy as jnp
from jax import lax
from jax.experimental import pallas as pl
from jax.experimental.pallas import tpu as pltpu


def _round_up(n, m):
    return ((n + m - 1) // m) * m


def _transform_kernel(x_ref, wt_ref, b_ref, gamma_ref, beta_ref, o_ref):
    # (TM, H) token tile and (H, H) pre-transposed weight, native dtypes.
    x = x_ref[...]
    wt = wt_ref[...]

    # Dense: y = x @ W.T  (W was transposed in the wrapper), f32 accumulation.
    h = jnp.dot(x, wt, preferred_element_type=jnp.float32)
    h = h + b_ref[...].astype(jnp.float32)            # (1, H) broadcast, used once

    # Exact-erf GELU (matches torch.erf reference).
    h = h * 0.5 * (1.0 + lax.erf(h * (1.0 / math.sqrt(2.0))))

    # BertLayerNorm, eps = 1e-12, biased variance over the hidden axis.
    # Single-pass stats: var = E[h^2] - mean^2, all in f32.
    hidden = h.shape[-1]
    inv_h = jnp.float32(1.0 / hidden)
    s1 = jnp.sum(h, axis=-1, keepdims=True)
    s2 = jnp.sum(h * h, axis=-1, keepdims=True)
    mean = s1 * inv_h
    var = s2 * inv_h - mean * mean
    inv_std = lax.rsqrt(var + 1e-12)                  # EUP rsqrt, no divide

    h = (h - mean) * inv_std
    h = gamma_ref[...].astype(jnp.float32) * h + beta_ref[...].astype(jnp.float32)

    o_ref[...] = h.astype(o_ref.dtype)


def bert_prediction_head_transform(x, weight, bias, gamma, beta, *, tm=None):
    """x: (batch, seq, hidden). weight: (hidden, hidden) torch-Linear (out, in)
    layout. bias/gamma/beta: (hidden,). Returns (batch, seq, hidden)."""
    B, S, H = x.shape
    tokens = B * S
    x2d = x.reshape(tokens, H)

    # Token tile size: big enough to hide HBM latency, multiple of the sublane
    # packing for the activation dtype, never larger than the (padded) slab.
    row_align = 16 if x.dtype == jnp.bfloat16 else 8
    if tm is None:
        default_tm = 1024 if x.dtype == jnp.bfloat16 else 512
        tm = min(default_tm, _round_up(tokens, row_align))
    tm = max(row_align, _round_up(tm, row_align))

    # Pad tokens up to a tile multiple so the final store stays lane-dense and
    # unmasked; padded rows are sliced off afterwards.
    padded_tokens = _round_up(tokens, tm)
    if padded_tokens != tokens:
        x2d = jnp.pad(x2d, ((0, padded_tokens - tokens), (0, 0)))

    # Hoist the weight transpose out of the kernel (one-time XLA op).
    w_t = weight.T                                   # (in, out) so kernel does x @ W^T
    b2d = bias.reshape(1, H)
    g2d = gamma.reshape(1, H)
    be2d = beta.reshape(1, H)

    grid = (padded_tokens // tm,)

    # Explicit VMEM budget: resident W^T + double-buffered in/out tiles +
    # f32 temporaries, clamped to stay inside v7x's 64 MiB physical VMEM.
    x_isz = jnp.dtype(x.dtype).itemsize
    w_isz = jnp.dtype(w_t.dtype).itemsize
    est = (H * H * w_isz               # resident transposed weight
           + 2 * tm * H * x_isz        # double-buffered input tiles
           + 2 * tm * H * x_isz        # double-buffered output tiles
           + 6 * tm * H * 4            # f32 temporaries inside the kernel
           + 8 * H * 4)                # bias / gamma / beta
    vmem_limit = int(min(max(est, 4 << 20), 64 << 20))

    out = pl.pallas_call(
        _transform_kernel,
        out_shape=jax.ShapeDtypeStruct((padded_tokens, H), x.dtype),
        grid_spec=pltpu.PrefetchScalarGridSpec(
            num_scalar_prefetch=0,
            grid=grid,
            in_specs=[
                pl.BlockSpec((tm, H), lambda i: (i, 0)),   # x token tile
                pl.BlockSpec((H, H), lambda i: (0, 0)),    # W^T (VMEM resident)
                pl.BlockSpec((1, H), lambda i: (0, 0)),    # dense bias
                pl.BlockSpec((1, H), lambda i: (0, 0)),    # LN gamma
                pl.BlockSpec((1, H), lambda i: (0, 0)),    # LN beta
            ],
            out_specs=pl.BlockSpec((tm, H), lambda i: (i, 0)),
        ),
        compiler_params=pltpu.CompilerParams(
            dimension_semantics=("parallel",),
            vmem_limit_bytes=vmem_limit,
        ),
    )(x2d, w_t, b2d, g2d, be2d)

    return out[:tokens].reshape(B, S, H)


def _reference(x, weight, bias, gamma, beta):
    h = jnp.einsum("bsh,oh->bso", x.astype(jnp.float32),
                   weight.astype(jnp.float32)) + bias.astype(jnp.float32)
    h = h * 0.5 * (1.0 + lax.erf(h / math.sqrt(2.0)))
    mean = jnp.mean(h, axis=-1, keepdims=True)
    var = jnp.mean(jnp.square(h - mean), axis=-1, keepdims=True)
    return (gamma.astype(jnp.float32) * (h - mean) / jnp.sqrt(var + 1e-12)
            + beta.astype(jnp.float32))


if __name__ == "__main__":
    # Small shapes implied by the forward: (batch, seq, hidden).
    B, S, H = 2, 8, 128

    key = jax.random.PRNGKey(0)
    kx, kw, kb, kg, kbe = jax.random.split(key, 5)

    x = jax.random.normal(kx, (B, S, H), dtype=jnp.float32)
    # Deterministic parameter init (nn.Linear-like scale) + LayerNorm affine.
    weight = jax.random.normal(kw, (H, H), dtype=jnp.float32) * (1.0 / math.sqrt(H))
    bias = jax.random.normal(kb, (H,), dtype=jnp.float32) * 0.02
    gamma = 1.0 + 0.01 * jax.random.normal(kg, (H,), dtype=jnp.float32)
    beta = 0.01 * jax.random.normal(kbe, (H,), dtype=jnp.float32)

    out = bert_prediction_head_transform(x, weight, bias, gamma, beta)
    out = jax.block_until_ready(out)

    ref = _reference(x, weight, bias, gamma, beta)
    assert out.shape == (B, S, H)
    assert jnp.allclose(out, ref.astype(out.dtype), atol=1e-4, rtol=1e-4)

    print("KERNEL_OK")
</pallas_src>

<mosaic_0001>
module attributes {stable_mosaic.version = 11 : i64} {
  func.func @_transform_kernel(%arg0: i32, %arg1: memref<16x128xf32, #tpu.memory_space<vmem>>, %arg2: memref<128x128xf32, #tpu.memory_space<vmem>>, %arg3: memref<1x128xf32, #tpu.memory_space<vmem>>, %arg4: memref<1x128xf32, #tpu.memory_space<vmem>>, %arg5: memref<1x128xf32, #tpu.memory_space<vmem>>, %arg6: memref<16x128xf32, #tpu.memory_space<vmem>>) attributes {dimension_semantics = [#tpu.dimension_semantics<parallel>], iteration_bounds = array<i64: 1>, scalar_prefetch = 0 : i64, scratch_operands = 0 : i64, tpu.core_type = #tpu.core_type<tc>, window_params = [{transform_indices = @transform_0, window_bounds = array<i64: 16, 128>}, {pipeline_mode = #tpu.pipeline_mode<synchronous>, transform_indices = @transform_1, window_bounds = array<i64: 128, 128>}, {pipeline_mode = #tpu.pipeline_mode<synchronous>, transform_indices = @transform_2, window_bounds = array<i64: 1, 128>}, {pipeline_mode = #tpu.pipeline_mode<synchronous>, transform_indices = @transform_3, window_bounds = array<i64: 1, 128>}, {pipeline_mode = #tpu.pipeline_mode<synchronous>, transform_indices = @transform_4, window_bounds = array<i64: 1, 128>}, {transform_indices = @transform_5, window_bounds = array<i64: 16, 128>}]} {
    %c0 = arith.constant 0 : index
    %c0_0 = arith.constant 0 : index
    %0 = vector.load %arg1[%c0, %c0_0] : memref<16x128xf32, #tpu.memory_space<vmem>>, vector<16x128xf32>
    %c0_1 = arith.constant 0 : index
    %c0_2 = arith.constant 0 : index
    %1 = vector.load %arg2[%c0_1, %c0_2] : memref<128x128xf32, #tpu.memory_space<vmem>>, vector<128x128xf32>
    %cst = arith.constant dense<0.000000e+00> : vector<16x128xf32>
    %2 = tpu.matmul %0, %1, %cst {dimension_numbers = #tpu.dot_dimension_numbers<[1], [0], [0], [1], [0, 0, 1, 1], [], []>} : vector<16x128xf32>, vector<128x128xf32>, vector<16x128xf32> -> vector<16x128xf32>
    %c0_3 = arith.constant 0 : index
    %c0_4 = arith.constant 0 : index
    %3 = vector.load %arg3[%c0_3, %c0_4] : memref<1x128xf32, #tpu.memory_space<vmem>>, vector<1x128xf32>
    %4 = vector.broadcast %3 : vector<1x128xf32> to vector<16x128xf32>
    %5 = arith.addf %2, %4 : vector<16x128xf32>
    %cst_5 = arith.constant 5.000000e-01 : f32
    %6 = vector.broadcast %cst_5 : f32 to vector<16x128xf32>
    %7 = arith.mulf %5, %6 : vector<16x128xf32>
    %cst_6 = arith.constant 0.707106769 : f32
    %8 = vector.broadcast %cst_6 : f32 to vector<16x128xf32>
    %9 = arith.mulf %5, %8 : vector<16x128xf32>
    %10 = math.erf %9 : vector<16x128xf32>
    %cst_7 = arith.constant 1.000000e+00 : f32
    %11 = vector.broadcast %cst_7 : f32 to vector<16x128xf32>
    %12 = arith.addf %11, %10 : vector<16x128xf32>
    %13 = arith.mulf %7, %12 : vector<16x128xf32>
    %cst_8 = arith.constant dense<0.000000e+00> : vector<16xf32>
    %14 = vector.multi_reduction <add>, %13, %cst_8 [1] : vector<16x128xf32> to vector<16xf32>
    %15 = vector.shape_cast %14 : vector<16xf32> to vector<16x1xf32>
    %16 = arith.mulf %13, %13 : vector<16x128xf32>
    %cst_9 = arith.constant dense<0.000000e+00> : vector<16xf32>
    %17 = vector.multi_reduction <add>, %16, %cst_9 [1] : vector<16x128xf32> to vector<16xf32>
    %18 = vector.shape_cast %17 : vector<16xf32> to vector<16x1xf32>
    %cst_10 = arith.constant 7.812500e-03 : f32
    %19 = vector.broadcast %cst_10 : f32 to vector<16x1xf32>
    %20 = arith.mulf %15, %19 : vector<16x1xf32>
    %cst_11 = arith.constant 7.812500e-03 : f32
    %21 = vector.broadcast %cst_11 : f32 to vector<16x1xf32>
    %22 = arith.mulf %18, %21 : vector<16x1xf32>
    %23 = arith.mulf %20, %20 : vector<16x1xf32>
    %24 = arith.subf %22, %23 : vector<16x1xf32>
    %cst_12 = arith.constant 9.99999996E-13 : f32
    %25 = vector.broadcast %cst_12 : f32 to vector<16x1xf32>
    %26 = arith.addf %24, %25 : vector<16x1xf32>
    %27 = math.rsqrt %26 : vector<16x1xf32>
    %28 = vector.broadcast %20 : vector<16x1xf32> to vector<16x128xf32>
    %29 = arith.subf %13, %28 : vector<16x128xf32>
    %30 = vector.broadcast %27 : vector<16x1xf32> to vector<16x128xf32>
    %31 = arith.mulf %29, %30 : vector<16x128xf32>
    %c0_13 = arith.constant 0 : index
    %c0_14 = arith.constant 0 : index
    %32 = vector.load %arg4[%c0_13, %c0_14] : memref<1x128xf32, #tpu.memory_space<vmem>>, vector<1x128xf32>
    %33 = vector.broadcast %32 : vector<1x128xf32> to vector<16x128xf32>
    %34 = arith.mulf %33, %31 : vector<16x128xf32>
    %c0_15 = arith.constant 0 : index
    %c0_16 = arith.constant 0 : index
    %35 = vector.load %arg5[%c0_15, %c0_16] : memref<1x128xf32, #tpu.memory_space<vmem>>, vector<1x128xf32>
    %36 = vector.broadcast %35 : vector<1x128xf32> to vector<16x128xf32>
    %37 = arith.addf %34, %36 : vector<16x128xf32>
    %c0_17 = arith.constant 0 : index
    %c0_18 = arith.constant 0 : index
    %38 = vector.load %arg6[%c0_17, %c0_18] : memref<16x128xf32, #tpu.memory_space<vmem>>, vector<16x128xf32>
    tpu.vector_store %arg6[%c0_17, %c0_18], %37 {strides = array<i32>} : memref<16x128xf32, #tpu.memory_space<vmem>>, vector<16x128xf32>,
    return
  }
  func.func @transform_0(%arg0: i32) -> (i32, i32) {
    %c0_i32 = arith.constant 0 : i32
    %c0_i32_0 = arith.constant 0 : i32
    return %arg0, %c0_i32 : i32, i32
  }
  func.func @transform_1(%arg0: i32) -> (i32, i32) {
    %c0_i32 = arith.constant 0 : i32
    %c0_i32_0 = arith.constant 0 : i32
    %c0_i32_1 = arith.constant 0 : i32
    return %c0_i32, %c0_i32_0 : i32, i32
  }
  func.func @transform_2(%arg0: i32) -> (i32, i32) {
    %c0_i32 = arith.constant 0 : i32
    %c0_i32_0 = arith.constant 0 : i32
    %c0_i32_1 = arith.constant 0 : i32
    return %c0_i32, %c0_i32_0 : i32, i32
  }
  func.func @transform_3(%arg0: i32) -> (i32, i32) {
    %c0_i32 = arith.constant 0 : i32
    %c0_i32_0 = arith.constant 0 : i32
    %c0_i32_1 = arith.constant 0 : i32
    return %c0_i32, %c0_i32_0 : i32, i32
  }
  func.func @transform_4(%arg0: i32) -> (i32, i32) {
    %c0_i32 = arith.constant 0 : i32
    %c0_i32_0 = arith.constant 0 : i32
    %c0_i32_1 = arith.constant 0 : i32
    return %c0_i32, %c0_i32_0 : i32, i32
  }
  func.func @transform_5(%arg0: i32) -> (i32, i32) {
    %c0_i32 = arith.constant 0 : i32
    %c0_i32_0 = arith.constant 0 : i32
    return %arg0, %c0_i32 : i32, i32
  }
}

</mosaic_0001>

<llo_original>
// kernel: tpu_custom_call.1
$region0: #{tpu_custom_call.1}
  #allocation0 [shape = 'u32[]', space=smem, size = 0x4, offset = 0x4, fixed_abs, tag = 'smem constant byte address 0x4 - core index']
  #allocation1 [shape = 'u32[144,128]{1,0:T(1,128)}', space=vmem, size = 0x12000, scoped, tag = 'internal scratch']
  %s0 = inlined_call_operand.hbm [shape: f32[16,128], index: 0, kind: input, shape index: {}]
  %s1 = inlined_call_operand.hbm [shape: f32[128,128], index: 1, kind: input, shape index: {}]
  %s2 = inlined_call_operand.vmem [shape: f32[1,128], index: 2, kind: input, shape index: {}]
  %s3 = inlined_call_operand.vmem [shape: f32[1,128], index: 3, kind: input, shape index: {}]
  %s4 = inlined_call_operand.vmem [shape: f32[1,128], index: 4, kind: input, shape index: {}]
  %s5 = inlined_call_operand.hbm [shape: f32[16,128], index: 5, kind: output, shape index: {}]
  %s6 = sld [smem:[#allocation0]]
  $region38: #{tpu_custom_call.1} parent=0
    _
  %s8 = ssub.s32 1, %s6
  %s9 = scalar_select 0, %s8, %s6
  $region1: #{tpu_custom_call.1} parent=0
    #allocation2 [shape = 'u8[8192]{0}', space=vmem, size = 0x2000, scoped, tag = 'input window, operand 0, single buffered']
    #allocation3 [shape = 's32[1]{0}', space=sflag, size = 0x4, scoped, tag = 'scoped memory for tpu_custom_call.1']
    #allocation4 [shape = 's32[1]{0}', space=sflag, size = 0x4, scoped, tag = 'scoped memory for tpu_custom_call.1']
    #allocation5 [shape = 'u8[65536]{0}', space=vmem, size = 0x10000, scoped, tag = 'input window, operand 1, single buffered']
    #allocation6 [shape = 's32[1]{0}', space=sflag, size = 0x4, scoped, tag = 'scoped memory for tpu_custom_call.1']
    #allocation7 [shape = 'u8[8192]{0}', space=vmem, size = 0x2000, scoped, tag = 'output window, operand 0, single buffered']
    %10 = vsyncpa [#allocation3], 0
    %11 = vsyncpa [#allocation6], 0
    %12 = vsyncpa [#allocation4], 0
    // Predicated region
    $region2: #{tpu_custom_call.1} parent=1 // pred_check
      _
    $region3: #{tpu_custom_call.1} parent=1 // pred_check_branch
      %14 = sbr.rel (0) target = $region5
    $region4: #{tpu_custom_call.1} parent=1 // pred_region
      %s16 = ssub.s32 256, 256
      %17 = vsyncadd [#allocation3], %s16
      %s18 = sshll.u32 [#allocation2], 4
      %s19 = int_to_ptr.vmem [resolvable:$true] %s18
      %24 = dma.hbm_to_vmem [thread:$0]  %s0, 256, %s19, [#allocation3], 128, 128, 8
    $region5: #{tpu_custom_call.1} parent=1 // pred_fallthru
      _
    // Predicated region
    $region6: #{tpu_custom_call.1} parent=1 // pred_check
      _
    $region7: #{tpu_custom_call.1} parent=1 // pred_check_branch
      %26 = sbr.rel (0) target = $region9
    $region8: #{tpu_custom_call.1} parent=1 // pred_region
      %s28 = ssub.s32 2048, 2048
      %29 = vsyncadd [#allocation6], %s28
      %s30 = sshll.u32 [#allocation5], 4
      %s31 = int_to_ptr.vmem [resolvable:$true] %s30
      %36 = dma.hbm_to_vmem [thread:$0]  %s1, 2048, %s31, [#allocation6], 128, 128, 8
    $region9: #{tpu_custom_call.1} parent=1 // pred_fallthru
      _
    // Predicated region
    $region10: #{tpu_custom_call.1} parent=1 // pred_check
      _
    $region11: #{tpu_custom_call.1} parent=1 // pred_check_branch
      %38 = sbr.rel (0) target = $region13
    $region12: #{tpu_custom_call.1} parent=1 // pred_region
      _
    $region13: #{tpu_custom_call.1} parent=1 // pred_fallthru
      _
    // Predicated region
    $region14: #{tpu_custom_call.1} parent=1 // pred_check
      _
    $region15: #{tpu_custom_call.1} parent=1 // pred_check_branch
      %40 = sbr.rel (0) target = $region17
    $region16: #{tpu_custom_call.1} parent=1 // pred_region
      _
    $region17: #{tpu_custom_call.1} parent=1 // pred_fallthru
      _
    // Predicated region
    $region18: #{tpu_custom_call.1} parent=1 // pred_check
      _
    $region19: #{tpu_custom_call.1} parent=1 // pred_check_branch
      %42 = sbr.rel (0) target = $region21
    $region20: #{tpu_custom_call.1} parent=1 // pred_region
      _
    $region21: #{tpu_custom_call.1} parent=1 // pred_fallthru
      _
    // Predicated region
    $region22: #{tpu_custom_call.1} parent=1 // pred_check
      _
    $region23: #{tpu_custom_call.1} parent=1 // pred_check_branch
      %44 = sbr.rel (0) target = $region25
    $region24: #{tpu_custom_call.1} parent=1 // pred_region
      %45 = dma.done [#allocation3], 256
    $region25: #{tpu_custom_call.1} parent=1 // pred_fallthru
      _
    // Predicated region
    $region26: #{tpu_custom_call.1} parent=1 // pred_check
      _
    $region27: #{tpu_custom_call.1} parent=1 // pred_check_branch
      %47 = sbr.rel (0) target = $region29
    $region28: #{tpu_custom_call.1} parent=1 // pred_region
      %48 = dma.done [#allocation6], 2048
    $region29: #{tpu_custom_call.1} parent=1 // pred_fallthru
      _
    %v49 = vld [vmem:[#allocation2] sm:$0xff]
    %v50 = vld [vmem:[#allocation2 + $0x8] sm:$0xff]
    %v51 = vld [vmem:[#allocation5] sm:$0xff]
    %v52 = vld [vmem:[#allocation5 + $0x8] sm:$0xff]
    %v53 = vld [vmem:[#allocation5 + $0x10] sm:$0xff]
    %v54 = vld [vmem:[#allocation5 + $0x18] sm:$0xff]
    %v55 = vld [vmem:[#allocation5 + $0x20] sm:$0xff]
    %v56 = vld [vmem:[#allocation5 + $0x28] sm:$0xff]
    %v57 = vld [vmem:[#allocation5 + $0x30] sm:$0xff]
    %v58 = vld [vmem:[#allocation5 + $0x38] sm:$0xff]
    %v59 = vld [vmem:[#allocation5 + $0x40] sm:$0xff]
    %v60 = vld [vmem:[#allocation5 + $0x48] sm:$0xff]
    %v61 = vld [vmem:[#allocation5 + $0x50] sm:$0xff]
    %v62 = vld [vmem:[#allocation5 + $0x58] sm:$0xff]
    %v63 = vld [vmem:[#allocation5 + $0x60] sm:$0xff]
    %v64 = vld [vmem:[#allocation5 + $0x68] sm:$0xff]
    %v65 = vld [vmem:[#allocation5 + $0x70] sm:$0xff]
    %v66 = vld [vmem:[#allocation5 + $0x78] sm:$0xff]
    %v67 = vld [vmem:[%s2] sm:$0x1]
    %v69 = vlaneseq
    %v70 = vshrl.u32 %v69, 7
    %v71 = vsub.s32 0, %v70
    %v72 = vrot.slane %v67, %v71
    %74 = vmatprep.subr.mxu0 0.0
    %75 = vmatpush1.msra.mxu0 %v66
    %76 = vmatprep.subr.mxu0 0.0
    %77 = vmatpush1.msra.mxu0 %v65
    %78 = vmatprep.subr.mxu0 0.0
    %79 = vmatpush1.msra.mxu0 %v64
    %80 = vmatprep.subr.mxu0 0.0
    %81 = vmatpush1.msra.mxu0 %v63
    %82 = vmatprep.subr.mxu0 0.0
    %83 = vmatpush1.msra.mxu0 %v62
    %84 = vmatprep.subr.mxu0 0.0
    %85 = vmatpush1.msra.mxu0 %v61
    %86 = vmatprep.subr.mxu0 0.0
    %87 = vmatpush1.msra.mxu0 %v60
    %88 = vmatprep.subr.mxu0 0.0
    %89 = vmatpush1.msra.mxu0 %v59
    %90 = vmatprep.subr.mxu0 0.0
    %91 = vmatpush1.msra.mxu0 %v58
    %92 = vmatprep.subr.mxu0 0.0
    %93 = vmatpush1.msra.mxu0 %v57
    %94 = vmatprep.subr.mxu0 0.0
    %95 = vmatpush1.msra.mxu0 %v56
    %96 = vmatprep.subr.mxu0 0.0
    %97 = vmatpush1.msra.mxu0 %v55
    %98 = vmatprep.subr.mxu0 0.0
    %99 = vmatpush1.msra.mxu0 %v54
    %100 = vmatprep.subr.mxu0 0.0
    %101 = vmatpush1.msra.mxu0 %v53
    %102 = vmatprep.subr.mxu0 0.0
    %103 = vmatpush1.msra.mxu0 %v52
    %104 = vmatprep.subr.mxu0 0.0
    %105 = vmatpush1.msra.mxu0 %v51
    %106 = vmatprep.subr.mxu0 0.0
    %107 = vmatpush2.msra.mxu0 0.0
    %108 = vmatprep.subr.mxu0 0.0
    %109 = vmatpush2.msra.mxu0 0.0
    %110 = vmatprep.subr.mxu0 0.0
    %111 = vmatpush2.msra.mxu0 0.0
    %112 = vmatprep.subr.mxu0 0.0
    %113 = vmatpush2.msra.mxu0 0.0
    %114 = vmatprep.subr.mxu0 0.0
    %115 = vmatpush2.msra.mxu0 0.0
    %116 = vmatprep.subr.mxu0 0.0
    %117 = vmatpush2.msra.mxu0 0.0
    %118 = vmatprep.subr.mxu0 0.0
    %119 = vmatpush2.msra.mxu0 0.0
    %120 = vmatprep.subr.mxu0 0.0
    %121 = vmatpush2.msra.mxu0 0.0
    %122 = vmatprep.subr.mxu0 0.0
    %123 = vmatpush2.msra.mxu0 0.0
    %124 = vmatprep.subr.mxu0 0.0
    %125 = vmatpush2.msra.mxu0 0.0
    %126 = vmatprep.subr.mxu0 0.0
    %127 = vmatpush2.msra.mxu0 0.0
    %128 = vmatprep.subr.mxu0 0.0
    %129 = vmatpush2.msra.mxu0 0.0
    %130 = vmatprep.subr.mxu0 0.0
    %131 = vmatpush2.msra.mxu0 0.0
    %132 = vmatprep.subr.mxu0 0.0
    %133 = vmatpush2.msra.mxu0 0.0
    %134 = vmatprep.subr.mxu0 0.0
    %135 = vmatpush2.msra.mxu0 0.0
    %136 = vmatprep.subr.mxu0 0.0
    %137 = vmatpush2.msra.mxu0 0.0
    %138 = vmatprep.mubr.f32.mxu0 0.0
    %139 = vmatmul.mubr.f32.gmra.mxu0 %v49
    %v140 = vpop.f32.mrf.mxu0
    %v141 = vadd.f32 %v72, %v140
    %v142 = vpop.f32.mrf.mxu0
    %143 = vmatprep.mubr.f32.mxu0 0.0
    %144 = vmatmul.mubr.f32.gmra.mxu0 %v50
    %v145 = vpop.f32.mrf.mxu0
    %v146 = vadd.f32 %v72, %v145
    %v147 = vpop.f32.mrf.mxu0
    %148 = vdwg.mxu0
    %v149 = vmul.f32 %v141, 0.5
    %v150 = vmul.f32 %v146, 0.5
    %v151 = vmul.f32 %v141, 0.70710677
    %v152 = vmul.f32 %v146, 0.70710677
    %v153 = verf.f32.pop %v151
    %v154 = verf.f32.pop %v152
    %v155 = vadd.f32 %v153, 1.0
    %v156 = vadd.f32 %v154, 1.0
    %v157 = vmul.f32 %v149, %v155
    %v158 = vmul.f32 %v150, %v156
    %159 = vadd.xlane.f32.xlu0 %v157
    %v160 = vpop.xlane.xlu0 %159
    %161 = vadd.xlane.f32.xlu0 %v158
    %v162 = vpop.xlane.xlu0 %161
    %v163 = vmul.f32 %v157, %v157
    %v164 = vmul.f32 %v158, %v158
    %165 = vadd.xlane.f32.xlu0 %v163
    %v166 = vpop.xlane.xlu0 %165
    %167 = vadd.xlane.f32.xlu0 %v164
    %v168 = vpop.xlane.xlu0 %167
    %v169 = vmul.f32 %v160, 0.0078125
    %v170 = vmul.f32 %v162, 0.0078125
    %v171 = vmul.f32 %v166, 0.0078125
    %v172 = vmul.f32 %v168, 0.0078125
    %v173 = vmul.f32 %v169, %v169
    %v174 = vmul.f32 %v170, %v170
    %v175 = vsub.f32 %v171, %v173
    %v176 = vsub.f32 %v172, %v174
    %v177 = vadd.f32 %v175, 1e-12
    %v178 = vadd.f32 %v176, 1e-12
    %v179 = vrsqrt.pop %v177
    %v180 = vrsqrt.pop %v178
    %v181 = vsub.f32 %v157, %v169
    %v182 = vsub.f32 %v158, %v170
    %v183 = vmul.f32 %v181, %v179
    %v184 = vmul.f32 %v182, %v180
    %v185 = vld [vmem:[%s3] sm:$0x1]
    %v187 = vlaneseq
    %v188 = vshrl.u32 %v187, 7
    %v189 = vsub.s32 0, %v188
    %v190 = vrot.slane %v185, %v189
    %v192 = vmul.f32 %v190, %v183
    %v193 = vmul.f32 %v190, %v184
    %v194 = vld [vmem:[%s4] sm:$0x1]
    %v196 = vlaneseq
    %v197 = vshrl.u32 %v196, 7
    %v198 = vsub.s32 0, %v197
    %v199 = vrot.slane %v194, %v198
    %v201 = vadd.f32 %v192, %v199
    %v202 = vadd.f32 %v193, %v199
    %203 = vst [vmem:[#allocation7] sm:$0xff] %v201
    %204 = vst [vmem:[#allocation7 + $0x8] sm:$0xff] %v202
    // Predicated region
    $region30: #{tpu_custom_call.1} parent=1 // pred_check
      _
    $region31: #{tpu_custom_call.1} parent=1 // pred_check_branch
      %206 = sbr.rel (0) target = $region33
    $region32: #{tpu_custom_call.1} parent=1 // pred_region
      %s208 = ssub.s32 256, 256
      %209 = vsyncadd [#allocation4], %s208
      %s210 = sshll.u32 [#allocation7], 4
      %s211 = int_to_ptr.vmem [resolvable:$true] %s210
      %216 = dma.vmem_to_hbm [thread:$0]  %s211, 256, %s5, [#allocation4], 128, 128, 8
    $region33: #{tpu_custom_call.1} parent=1 // pred_fallthru
      _
    // Predicated region
    $region34: #{tpu_custom_call.1} parent=1 // pred_check
      _
    $region35: #{tpu_custom_call.1} parent=1 // pred_check_branch
      %218 = sbr.rel (0) target = $region37
    $region36: #{tpu_custom_call.1} parent=1 // pred_region
      %219 = dma.done [#allocation4], 256
    $region37: #{tpu_custom_call.1} parent=1 // pred_fallthru
      _
    %220 = vsyncpa [#allocation3], 1
    %221 = vsyncpa [#allocation6], 1
    %222 = vsyncpa [#allocation4], 1

</llo_original>
